<compile_context>
chip_gen: v6e
topology: v6e:2x2x1
jax: 0.10.0
libtpu: 0.0.40
codegen_flags: <defaults>
</compile_context>

<pallas_src>
import functools
import numpy as np
import jax
import jax.numpy as jnp
from jax.experimental import pallas as pl
from jax.experimental.pallas import tpu as pltpu


def make_positional_encoding(d_model: int, word_pad_len: int) -> jnp.ndarray:
    """Exactly replicates the torch table: pos / 10000**(i//2*2/d_model),
    sin on even columns, cos on odd columns."""
    pos = np.arange(word_pad_len, dtype=np.float64)[:, None]
    i = np.arange(d_model, dtype=np.float64)[None, :]
    angle = pos / np.power(10000.0, (np.floor(i / 2.0) * 2.0) / d_model)
    pe = angle.copy()
    pe[:, 0::2] = np.sin(angle[:, 0::2])
    pe[:, 1::2] = np.cos(angle[:, 1::2])
    return jnp.asarray(pe, dtype=np.float32)


# ---------------------------------------------------------------------------
# Kernels (operate on lane-dense (rows, L*D) blocks)
# ---------------------------------------------------------------------------

def _add_pe_kernel(emb_ref, pe_ref, out_ref):
    # emb_ref: (Bt, L*D), pe_ref: (1, L*D)  -> broadcasted add.
    out_ref[...] = emb_ref[...] + pe_ref[...]


def _add_pe_dropout_kernel(emb_ref, pe_ref, bits_ref, out_ref, *,
                           threshold: int, scale: float):
    # Integer-domain keep test: P(bits < threshold) = 1 - p  (inverted dropout).
    x = emb_ref[...] + pe_ref[...]
    keep = (bits_ref[...] < jnp.uint32(threshold)).astype(x.dtype)
    out_ref[...] = x * keep * jnp.asarray(scale, dtype=x.dtype)


# ---------------------------------------------------------------------------
# Wrapper
# ---------------------------------------------------------------------------

def _choose_row_block(num_rows: int, row_bytes: int,
                      target_bytes: int = 1 << 20) -> int:
    """Rows per grid step: ~1 MiB tiles, multiple of 8 (or the full extent)."""
    rows = max(1, target_bytes // max(row_bytes, 1))
    if rows >= num_rows:
        return num_rows                     # single-step / full extent
    return min(num_rows, max(8, (rows // 8) * 8))


def positional_encoding_forward(embeddings: jnp.ndarray,
                                pe: jnp.ndarray,
                                *,
                                dropout: float = 0.0,
                                training: bool = False,
                                rng: jax.Array | None = None) -> jnp.ndarray:
    """embeddings: (B, L, D) float32 ; pe: (L, D) float32.

    Note: the dropout mask is a function of `rng`; callers must supply a fresh
    key each training step to match torch.nn.Dropout's per-call randomness.
    """
    B, L, D = embeddings.shape
    assert pe.shape == (L, D)
    LD = L * D

    # Lane-dense flattening: last axis = L*D, broadcast pe over batch rows.
    emb2d = embeddings.reshape(B, LD)
    pe2d = pe.reshape(1, LD)

    bt = _choose_row_block(B, LD * 4)
    grid = (pl.cdiv(B, bt),)

    row_spec = pl.BlockSpec((bt, LD), lambda b: (b, 0))
    pe_spec = pl.BlockSpec((1, LD), lambda b: (0, 0))

    compiler_params = pltpu.CompilerParams(
        dimension_semantics=("parallel",),
        vmem_limit_bytes=32 * 1024 * 1024,   # explicit budget (v7x-safe)
    )
    out_shape = jax.ShapeDtypeStruct((B, LD), embeddings.dtype)

    use_dropout = training and dropout > 0.0
    if not use_dropout:
        out2d = pl.pallas_call(
            _add_pe_kernel,
            out_shape=out_shape,
            grid=grid,
            in_specs=[row_spec, pe_spec],
            out_specs=row_spec,
            compiler_params=compiler_params,
        )(emb2d, pe2d)
    else:
        if rng is None:
            rng = jax.random.PRNGKey(0)
        p = float(dropout)
        # keep probability = 1 - p, tested as  bits < (1-p) * 2**32
        threshold = int(min(round((1.0 - p) * 2.0 ** 32), 2 ** 32 - 1))
        scale = 1.0 / (1.0 - p)
        bits = jax.random.bits(rng, (B, LD), dtype=jnp.uint32)
        kernel = functools.partial(_add_pe_dropout_kernel,
                                   threshold=threshold, scale=scale)
        out2d = pl.pallas_call(
            kernel,
            out_shape=out_shape,
            grid=grid,
            in_specs=[row_spec, pe_spec, row_spec],
            out_specs=row_spec,
            compiler_params=compiler_params,
        )(emb2d, pe2d, bits)

    return out2d.reshape(B, L, D)


# ---------------------------------------------------------------------------
# Self-test
# ---------------------------------------------------------------------------

if __name__ == "__main__":
    # Small shapes implied by the forward pass: batch=2, word_pad_len=8, d_model=32.
    B, L, D = 2, 8, 32
    dropout_rate = 0.5

    key = jax.random.PRNGKey(0)
    k_emb, k_drop = jax.random.split(key)
    embeddings = jax.random.normal(k_emb, (B, L, D), dtype=jnp.float32)

    pe = make_positional_encoding(d_model=D, word_pad_len=L)
    ref = np.asarray(embeddings) + np.asarray(pe)[None, :, :]

    # Eval-mode forward (dropout is identity) — matches module.eval() semantics.
    out = positional_encoding_forward(embeddings, pe,
                                      dropout=dropout_rate, training=False)
    out = jax.block_until_ready(out)
    assert out.shape == (B, L, D)
    np.testing.assert_allclose(np.asarray(out), ref, rtol=1e-6, atol=1e-6)

    # Training-mode forward (fused inverted dropout).
    out_train = positional_encoding_forward(embeddings, pe,
                                            dropout=dropout_rate, training=True,
                                            rng=k_drop)
    out_train = jax.block_until_ready(out_train)
    assert out_train.shape == (B, L, D)
    # Every element must be either 0 (dropped) or ref / (1 - p) (kept, rescaled).
    ot = np.asarray(out_train)
    kept_val = ref / (1.0 - dropout_rate)
    ok = np.isclose(ot, 0.0, atol=1e-6) | np.isclose(ot, kept_val, rtol=1e-5, atol=1e-5)
    assert np.all(ok), "dropout output is neither zero nor rescaled input"

    print("KERNEL_OK")
</pallas_src>

<mosaic_0001>
module attributes {stable_mosaic.version = 11 : i64} {
  func.func @_add_pe_kernel(%arg0: i32, %arg1: memref<2x256xf32, #tpu.memory_space<vmem>>, %arg2: memref<1x256xf32, #tpu.memory_space<vmem>>, %arg3: memref<2x256xf32, #tpu.memory_space<vmem>>) attributes {dimension_semantics = [#tpu.dimension_semantics<parallel>], iteration_bounds = array<i64: 1>, scalar_prefetch = 0 : i64, scratch_operands = 0 : i64, tpu.core_type = #tpu.core_type<tc>, window_params = [{transform_indices = @transform_0, window_bounds = array<i64: 2, 256>}, {pipeline_mode = #tpu.pipeline_mode<synchronous>, transform_indices = @transform_1, window_bounds = array<i64: 1, 256>}, {transform_indices = @transform_2, window_bounds = array<i64: 2, 256>}]} {
    %c0 = arith.constant 0 : index
    %c0_0 = arith.constant 0 : index
    %0 = vector.load %arg1[%c0, %c0_0] : memref<2x256xf32, #tpu.memory_space<vmem>>, vector<2x256xf32>
    %c0_1 = arith.constant 0 : index
    %c0_2 = arith.constant 0 : index
    %1 = vector.load %arg2[%c0_1, %c0_2] : memref<1x256xf32, #tpu.memory_space<vmem>>, vector<1x256xf32>
    %2 = vector.broadcast %1 : vector<1x256xf32> to vector<2x256xf32>
    %3 = arith.addf %0, %2 : vector<2x256xf32>
    %c0_3 = arith.constant 0 : index
    %c0_4 = arith.constant 0 : index
    %4 = vector.load %arg3[%c0_3, %c0_4] : memref<2x256xf32, #tpu.memory_space<vmem>>, vector<2x256xf32>
    tpu.vector_store %arg3[%c0_3, %c0_4], %3 {strides = array<i32>} : memref<2x256xf32, #tpu.memory_space<vmem>>, vector<2x256xf32>,
    return
  }
  func.func @transform_0(%arg0: i32) -> (i32, i32) {
    %c0_i32 = arith.constant 0 : i32
    %c0_i32_0 = arith.constant 0 : i32
    return %arg0, %c0_i32 : i32, i32
  }
  func.func @transform_1(%arg0: i32) -> (i32, i32) {
    %c0_i32 = arith.constant 0 : i32
    %c0_i32_0 = arith.constant 0 : i32
    %c0_i32_1 = arith.constant 0 : i32
    return %c0_i32, %c0_i32_0 : i32, i32
  }
  func.func @transform_2(%arg0: i32) -> (i32, i32) {
    %c0_i32 = arith.constant 0 : i32
    %c0_i32_0 = arith.constant 0 : i32
    return %arg0, %c0_i32 : i32, i32
  }
}

</mosaic_0001>

<llo_original>
// kernel: tpu_custom_call.1
$region0: #{tpu_custom_call.1}
  #allocation0 [shape = 'u32[]', space=smem, size = 0x4, offset = 0x4, fixed_abs, tag = 'smem constant byte address 0x4 - core index']
  #allocation1 [shape = 'u32[144,128]{1,0:T(1,128)}', space=vmem, size = 0x12000, scoped, tag = 'internal scratch']
  %s0 = inlined_call_operand.hbm [shape: f32[2,256], index: 0, kind: input, shape index: {}]
  %s1 = inlined_call_operand.hbm [shape: f32[1,256], index: 1, kind: input, shape index: {}]
  %s2 = inlined_call_operand.hbm [shape: f32[2,256], index: 2, kind: output, shape index: {}]
  %s3 = sld [smem:[#allocation0]]
  $region26: #{tpu_custom_call.1} parent=0
    _
  %s5 = ssub.s32 1, %s3
  %s6 = scalar_select 0, %s5, %s3
  $region1: #{tpu_custom_call.1} parent=0
    #allocation2 [shape = 'u8[2048]{0}', space=vmem, size = 0x800, scoped, tag = 'input window, operand 0, single buffered']
    #allocation3 [shape = 's32[1]{0}', space=sflag, size = 0x4, scoped, tag = 'scoped memory for tpu_custom_call.1']
    #allocation4 [shape = 's32[1]{0}', space=sflag, size = 0x4, scoped, tag = 'scoped memory for tpu_custom_call.1']
    #allocation5 [shape = 'u8[1024]{0}', space=vmem, size = 0x400, scoped, tag = 'input window, operand 1, single buffered']
    #allocation6 [shape = 's32[1]{0}', space=sflag, size = 0x4, scoped, tag = 'scoped memory for tpu_custom_call.1']
    #allocation7 [shape = 'u8[2048]{0}', space=vmem, size = 0x800, scoped, tag = 'output window, operand 0, single buffered']
    %7 = vsyncpa [#allocation3], 0
    %8 = vsyncpa [#allocation6], 0
    %9 = vsyncpa [#allocation4], 0
    // Predicated region
    $region2: #{tpu_custom_call.1} parent=1 // pred_check
      _
    $region3: #{tpu_custom_call.1} parent=1 // pred_check_branch
      %11 = sbr.rel (0) target = $region5
    $region4: #{tpu_custom_call.1} parent=1 // pred_region
      %s13 = ssub.s32 64, 64
      %14 = vsyncadd [#allocation3], %s13
      %s16 = sshll.u32 [#allocation2], 4
      %s17 = int_to_ptr.vmem [resolvable:$true] %s16
      %19 = dma.hbm_to_vmem [thread:$0]  %s0, 64, %s17, [#allocation3]
    $region5: #{tpu_custom_call.1} parent=1 // pred_fallthru
      _
    // Predicated region
    $region6: #{tpu_custom_call.1} parent=1 // pred_check
      _
    $region7: #{tpu_custom_call.1} parent=1 // pred_check_branch
      %21 = sbr.rel (0) target = $region9
    $region8: #{tpu_custom_call.1} parent=1 // pred_region
      %s23 = ssub.s32 32, 32
      %24 = vsyncadd [#allocation6], %s23
      %s26 = sshll.u32 [#allocation5], 4
      %s27 = int_to_ptr.vmem [resolvable:$true] %s26
      %29 = dma.hbm_to_vmem [thread:$0]  %s1, 32, %s27, [#allocation6]
    $region9: #{tpu_custom_call.1} parent=1 // pred_fallthru
      _
    // Predicated region
    $region10: #{tpu_custom_call.1} parent=1 // pred_check
      _
    $region11: #{tpu_custom_call.1} parent=1 // pred_check_branch
      %31 = sbr.rel (0) target = $region13
    $region12: #{tpu_custom_call.1} parent=1 // pred_region
      %32 = dma.done [#allocation3], 64
    $region13: #{tpu_custom_call.1} parent=1 // pred_fallthru
      _
    // Predicated region
    $region14: #{tpu_custom_call.1} parent=1 // pred_check
      _
    $region15: #{tpu_custom_call.1} parent=1 // pred_check_branch
      %34 = sbr.rel (0) target = $region17
    $region16: #{tpu_custom_call.1} parent=1 // pred_region
      %35 = dma.done [#allocation6], 32
    $region17: #{tpu_custom_call.1} parent=1 // pred_fallthru
      _
    %v36 = vld [vmem:[#allocation2] sm:$0xf]
    %v37 = vld [vmem:[#allocation5] sm:$0x3]
    %v39 = vlaneseq
    %v40 = vshrl.u32 %v39, 7
    %v41 = vsub.s32 0, %v40
    %v42 = vrot.slane %v37, %v41
    %v43 = vlaneseq
    %v44 = vshrl.u32 %v43, 7
    %v45 = vsub.s32 1, %v44
    %v46 = vrot.slane %v37, %v45
    %v47 = vcombine.low %v42, %v46
    %v49 = vunpack.c.l.s4 1983009808
    %v50 = vunpack.c.0.s8 %v49
    %v51 = vlaneseq
    %v52 = vshrl.u32 %v51, 7
    %v53 = vsub.s32 %v50, %v52
    %v54 = vrot.slane %v47, %v53
    %v56 = vadd.f32 %v36, %v54
    %57 = vst [vmem:[#allocation7] sm:$0xf] %v56
    // Predicated region
    $region18: #{tpu_custom_call.1} parent=1 // pred_check
      _
    $region19: #{tpu_custom_call.1} parent=1 // pred_check_branch
      %59 = sbr.rel (0) target = $region21
    $region20: #{tpu_custom_call.1} parent=1 // pred_region
      %s61 = ssub.s32 64, 64
      %62 = vsyncadd [#allocation4], %s61
      %s64 = sshll.u32 [#allocation7], 4
      %s65 = int_to_ptr.vmem [resolvable:$true] %s64
      %67 = dma.vmem_to_hbm [thread:$0]  %s65, 64, %s2, [#allocation4]
    $region21: #{tpu_custom_call.1} parent=1 // pred_fallthru
      _
    // Predicated region
    $region22: #{tpu_custom_call.1} parent=1 // pred_check
      _
    $region23: #{tpu_custom_call.1} parent=1 // pred_check_branch
      %69 = sbr.rel (0) target = $region25
    $region24: #{tpu_custom_call.1} parent=1 // pred_region
      %70 = dma.done [#allocation4], 64
    $region25: #{tpu_custom_call.1} parent=1 // pred_fallthru
      _
    %71 = vsyncpa [#allocation3], 1
    %72 = vsyncpa [#allocation6], 1
    %73 = vsyncpa [#allocation4], 1

</llo_original>
